<compile_context>
chip_gen: v6e
topology: v6e:2x2x1
jax: 0.10.0
libtpu: 0.0.40
codegen_flags: <defaults>
</compile_context>

<pallas_src>
import functools
import math

import jax
import jax.numpy as jnp
from jax.experimental import pallas as pl
from jax.experimental.pallas import tpu as pltpu


def _round_up(x, m):
    return (x + m - 1) // m * m


def proxy_anchor_kernel(x_ref, p_ref, t_ref,
                        pos_ref, neg_ref, val_ref,
                        xn_ref, *,
                        nb_classes, c_tile, tiles_per_shard, padded,
                        mrg, alpha, mxu_dtype):
    shard = pl.program_id(0)     # "parallel" axis (v7x megacore shard)
    c_step = pl.program_id(1)    # "arbitrary" reduction axis over class tiles

    # --- init (first class tile of this shard) ------------------------------
    @pl.when(c_step == 0)
    def _init():
        x = x_ref[...].astype(jnp.float32)                       # (B, D)
        # l2_norm: x / sqrt(sum(x^2) + 1e-12)  (matches torch l2_norm)
        xn = x / jnp.sqrt(jnp.sum(x * x, axis=1, keepdims=True) + 1e-12)
        xn_ref[...] = xn.astype(mxu_dtype)
        pos_ref[...] = jnp.zeros_like(pos_ref)
        neg_ref[...] = jnp.zeros_like(neg_ref)
        val_ref[...] = jnp.zeros_like(val_ref)

    # --- per-tile work -------------------------------------------------------
    p = p_ref[...]                                               # (D, C_TILE), native dtype
    p32 = p.astype(jnp.float32)
    # Post-matmul column scaling (replaces the (C_TILE, D) f32 divide).
    # eps keeps zero-padded proxy columns finite; they are masked out below.
    inv_pnorm = jax.lax.rsqrt(jnp.sum(p32 * p32, axis=0, keepdims=True) + 1e-12)

    # cos = l2_norm(X) @ l2_norm(P).T  -- canonical (M,K)x(K,N) MXU matmul,
    # f32 accumulation, per-class norm applied as a column scale afterwards.
    cos = jax.lax.dot_general(
        xn_ref[...], p.astype(mxu_dtype),
        (((1,), (0,)), ((), ())),
        preferred_element_type=jnp.float32) * inv_pnorm          # (B, C_TILE)

    B = cos.shape[0]
    t = t_ref[...]                                               # (B, 1) int32
    tile_idx = shard * tiles_per_shard + c_step
    class_ids = tile_idx * c_tile + jax.lax.broadcasted_iota(
        jnp.int32, (B, c_tile), 1)
    pos_mask = class_ids == t                                    # bool (B, C_TILE)
    if padded:
        # exclude zero-padded proxy columns from the negative term
        neg_mask = jnp.logical_and(jnp.logical_not(pos_mask),
                                   class_ids < nb_classes)
    else:
        neg_mask = jnp.logical_not(pos_mask)

    # One EUP exp per element:
    #   pos_exp = exp(-alpha*(cos - mrg)) = exp(alpha*mrg) / exp(alpha*cos)
    #   neg_exp = exp( alpha*(cos + mrg)) = exp(alpha*mrg) * exp(alpha*cos)
    # approx reciprocal: deliberate ~2^-12 rel-err deviation (negligible after log1p).
    exp_amrg = float(math.exp(alpha * mrg))                      # trace-time const
    e = jnp.exp(alpha * cos)
    neg_exp = e * exp_amrg
    pos_exp = exp_amrg * pl.reciprocal(e, approx=True)

    p_sim_sum = jnp.sum(jnp.where(pos_mask, pos_exp, 0.0),
                        axis=0, keepdims=True)                   # (1, C_TILE)
    n_sim_sum = jnp.sum(jnp.where(neg_mask, neg_exp, 0.0),
                        axis=0, keepdims=True)                   # (1, C_TILE)
    pos_cnt = jnp.sum(jnp.where(pos_mask, 1.0, 0.0),
                      axis=0, keepdims=True)                     # (1, C_TILE)

    # Accumulate directly into the resident per-shard output blocks
    # (torch reference uses log(1 + x); keep that exact form).
    pos_ref[...] += jnp.log(1.0 + p_sim_sum)[None]
    neg_ref[...] += jnp.log(1.0 + n_sim_sum)[None]
    val_ref[...] += (pos_cnt > 0.0).astype(jnp.float32)[None]


def proxy_anchor_loss(X, T, proxies, *, mrg=0.1, alpha=32.0, c_tile=1024,
                      mxu_dtype=jnp.bfloat16):
    """X: (B, D), T: (B,) int labels, proxies: (C, D)  ->  scalar f32 loss."""
    B, D = X.shape
    C, D2 = proxies.shape
    assert D == D2
    # sklearn label_binarize returns a single column for nb_classes == 2;
    # this one-hot formulation only matches the reference for C > 2.
    assert C > 2, "Proxy_Anchor Pallas kernel assumes nb_classes > 2"

    # class-tile size: 128-lane aligned, no larger than the padded C
    c_pad_min = _round_up(C, 128)
    c_tile = _round_up(min(int(c_tile), c_pad_min), 128)
    c_pad = _round_up(C, c_tile)
    num_tiles = c_pad // c_tile
    # v7x megacore: split the class tiles across both TensorCores when possible
    num_shards = 2 if (num_tiles >= 2 and num_tiles % 2 == 0) else 1
    tiles_per_shard = num_tiles // num_shards

    # Pad proxies with zero rows (masked out of the neg term in-kernel) and
    # feed them transposed (D, C_pad) so the MXU rhs is canonical (K, N).
    proxies_p = proxies if c_pad == C else jnp.pad(
        proxies, ((0, c_pad - C), (0, 0)))
    proxies_t = proxies_p.T                                      # (D, C_pad)
    t2 = T.astype(jnp.int32).reshape(B, 1)

    kernel = functools.partial(
        proxy_anchor_kernel,
        nb_classes=C, c_tile=c_tile, tiles_per_shard=tiles_per_shard,
        padded=(c_pad != C), mrg=float(mrg), alpha=float(alpha),
        mxu_dtype=mxu_dtype)

    # Advisory roofline hint: ~2*B*C*D matmul flops, ~2 EUP ops per (B, C)
    # element (exp + approx reciprocal), proxy stream dominates bytes.
    cost = pl.CostEstimate(
        flops=int(2 * B * c_pad * D),
        transcendentals=int(2 * B * c_pad),
        bytes_accessed=int(c_pad * D * proxies.dtype.itemsize
                           + B * D * X.dtype.itemsize + B * 4
                           + num_shards * 3 * c_tile * 4))

    partial_shape = jax.ShapeDtypeStruct((num_shards, 1, c_tile), jnp.float32)
    out_block = pl.BlockSpec((1, 1, c_tile), lambda s, c: (s, 0, 0))

    pos_part, neg_part, val_part = pl.pallas_call(
        kernel,
        out_shape=(partial_shape, partial_shape, partial_shape),
        grid=(num_shards, tiles_per_shard),
        in_specs=[
            # X and T are resident (constant index); proxies stream per tile.
            pl.BlockSpec((B, D), lambda s, c: (0, 0)),
            pl.BlockSpec((D, c_tile),
                         lambda s, c: (0, s * tiles_per_shard + c)),
            pl.BlockSpec((B, 1), lambda s, c: (0, 0)),
        ],
        out_specs=(out_block, out_block, out_block),
        scratch_shapes=[
            pltpu.VMEM((B, D), mxu_dtype),                       # cached l2-normalized X
        ],
        compiler_params=pltpu.CompilerParams(
            dimension_semantics=("parallel", "arbitrary")),
        cost_estimate=cost,
    )(X, proxies_t, t2)

    # Trivial wrapper reduction over per-shard / per-lane partials.
    pos_sum = jnp.sum(pos_part)
    neg_sum = jnp.sum(neg_part)
    num_valid = jnp.maximum(jnp.sum(val_part), 1.0)   # guard 0/0 (ref would NaN)
    return pos_sum / num_valid + neg_sum / float(C)


if __name__ == "__main__":
    nb_classes = 16
    sz_embed = 32
    batch = 8
    mrg = 0.1
    alpha = 32.0

    key = jax.random.PRNGKey(0)
    k_prox, k_x, k_t = jax.random.split(key, 3)

    # Proxies: kaiming_normal_(mode='fan_out') on (C, D) -> std = sqrt(2 / C)
    proxies = jax.random.normal(k_prox, (nb_classes, sz_embed), dtype=jnp.float32)
    proxies = proxies * jnp.sqrt(2.0 / nb_classes)

    X = jax.random.normal(k_x, (batch, sz_embed), dtype=jnp.float32)
    T = jax.random.randint(k_t, (batch,), 0, nb_classes, dtype=jnp.int32)

    loss_fn = jax.jit(functools.partial(proxy_anchor_loss, mrg=mrg, alpha=alpha))
    loss = loss_fn(X, T, proxies)
    jax.block_until_ready(loss)
    print("KERNEL_OK")
</pallas_src>

<mosaic_0001>
module attributes {stable_mosaic.version = 11 : i64} {
  func.func @proxy_anchor_kernel(%arg0: i32, %arg1: i32, %arg2: memref<8x32xf32, #tpu.memory_space<vmem>>, %arg3: memref<32x128xf32, #tpu.memory_space<vmem>>, %arg4: memref<8x1xi32, #tpu.memory_space<vmem>>, %arg5: memref<1x1x128xf32, #tpu.memory_space<vmem>>, %arg6: memref<1x1x128xf32, #tpu.memory_space<vmem>>, %arg7: memref<1x1x128xf32, #tpu.memory_space<vmem>>, %arg8: memref<8x32xbf16, #tpu.memory_space<vmem>>) attributes {dimension_semantics = [#tpu.dimension_semantics<parallel>, #tpu.dimension_semantics<arbitrary>], iteration_bounds = array<i64: 1, 1>, scalar_prefetch = 0 : i64, scratch_operands = 1 : i64, tpu.core_type = #tpu.core_type<tc>, window_params = [{pipeline_mode = #tpu.pipeline_mode<synchronous>, transform_indices = @transform_0, window_bounds = array<i64: 8, 32>}, {transform_indices = @transform_1, window_bounds = array<i64: 32, 128>}, {pipeline_mode = #tpu.pipeline_mode<synchronous>, transform_indices = @transform_2, window_bounds = array<i64: 8, 1>}, {transform_indices = @transform_3, window_bounds = array<i64: 1, 1, 128>}, {transform_indices = @transform_4, window_bounds = array<i64: 1, 1, 128>}, {transform_indices = @transform_5, window_bounds = array<i64: 1, 1, 128>}]} {
    %c0_i32 = arith.constant 0 : i32
    %0 = arith.cmpi eq, %arg1, %c0_i32 : i32
    %1 = arith.extui %0 : i1 to i32
    %c0_i32_0 = arith.constant 0 : i32
    %2 = arith.cmpi ne, %1, %c0_i32_0 : i32
    scf.if %2 {
      %c0_40 = arith.constant 0 : index
      %c0_41 = arith.constant 0 : index
      %71 = vector.load %arg2[%c0_40, %c0_41] : memref<8x32xf32, #tpu.memory_space<vmem>>, vector<8x32xf32>
      %72 = arith.mulf %71, %71 : vector<8x32xf32>
      %cst_42 = arith.constant dense<0.000000e+00> : vector<8xf32>
      %73 = vector.multi_reduction <add>, %72, %cst_42 [1] : vector<8x32xf32> to vector<8xf32>
      %74 = vector.shape_cast %73 : vector<8xf32> to vector<8x1xf32>
      %cst_43 = arith.constant 9.99999996E-13 : f32
      %75 = vector.broadcast %cst_43 : f32 to vector<8x1xf32>
      %76 = arith.addf %74, %75 : vector<8x1xf32>
      %77 = math.sqrt %76 : vector<8x1xf32>
      %78 = vector.broadcast %77 : vector<8x1xf32> to vector<8x32xf32>
      %79 = arith.divf %71, %78 : vector<8x32xf32>
      %80 = arith.truncf %79 : vector<8x32xf32> to vector<8x32xbf16>
      %c0_44 = arith.constant 0 : index
      %c0_45 = arith.constant 0 : index
      %81 = vector.load %arg8[%c0_44, %c0_45] : memref<8x32xbf16, #tpu.memory_space<vmem>>, vector<8x32xbf16>
      tpu.vector_store %arg8[%c0_44, %c0_45], %80 {strides = array<i32>} : memref<8x32xbf16, #tpu.memory_space<vmem>>, vector<8x32xbf16>,
      %cst_46 = arith.constant 0.000000e+00 : f32
      %82 = vector.broadcast %cst_46 : f32 to vector<1x1x128xf32>
      %c0_47 = arith.constant 0 : index
      %c0_48 = arith.constant 0 : index
      %c0_49 = arith.constant 0 : index
      %83 = vector.load %arg5[%c0_47, %c0_48, %c0_49] : memref<1x1x128xf32, #tpu.memory_space<vmem>>, vector<1x1x128xf32>
      tpu.vector_store %arg5[%c0_47, %c0_48, %c0_49], %82 {strides = array<i32>} : memref<1x1x128xf32, #tpu.memory_space<vmem>>, vector<1x1x128xf32>,
      %cst_50 = arith.constant 0.000000e+00 : f32
      %84 = vector.broadcast %cst_50 : f32 to vector<1x1x128xf32>
      %c0_51 = arith.constant 0 : index
      %c0_52 = arith.constant 0 : index
      %c0_53 = arith.constant 0 : index
      %85 = vector.load %arg6[%c0_51, %c0_52, %c0_53] : memref<1x1x128xf32, #tpu.memory_space<vmem>>, vector<1x1x128xf32>
      tpu.vector_store %arg6[%c0_51, %c0_52, %c0_53], %84 {strides = array<i32>} : memref<1x1x128xf32, #tpu.memory_space<vmem>>, vector<1x1x128xf32>,
      %cst_54 = arith.constant 0.000000e+00 : f32
      %86 = vector.broadcast %cst_54 : f32 to vector<1x1x128xf32>
      %c0_55 = arith.constant 0 : index
      %c0_56 = arith.constant 0 : index
      %c0_57 = arith.constant 0 : index
      %87 = vector.load %arg7[%c0_55, %c0_56, %c0_57] : memref<1x1x128xf32, #tpu.memory_space<vmem>>, vector<1x1x128xf32>
      tpu.vector_store %arg7[%c0_55, %c0_56, %c0_57], %86 {strides = array<i32>} : memref<1x1x128xf32, #tpu.memory_space<vmem>>, vector<1x1x128xf32>,
    } else {
    }
    %c0 = arith.constant 0 : index
    %c0_1 = arith.constant 0 : index
    %3 = vector.load %arg3[%c0, %c0_1] : memref<32x128xf32, #tpu.memory_space<vmem>>, vector<32x128xf32>
    %4 = arith.mulf %3, %3 : vector<32x128xf32>
    %cst = arith.constant dense<0.000000e+00> : vector<128xf32>
    %5 = vector.multi_reduction <add>, %4, %cst [0] : vector<32x128xf32> to vector<128xf32>
    %6 = vector.shape_cast %5 : vector<128xf32> to vector<1x128xf32>
    %cst_2 = arith.constant 9.99999996E-13 : f32
    %7 = vector.broadcast %cst_2 : f32 to vector<1x128xf32>
    %8 = arith.addf %6, %7 : vector<1x128xf32>
    %9 = math.rsqrt %8 : vector<1x128xf32>
    %c0_3 = arith.constant 0 : index
    %c0_4 = arith.constant 0 : index
    %10 = vector.load %arg8[%c0_3, %c0_4] : memref<8x32xbf16, #tpu.memory_space<vmem>>, vector<8x32xbf16>
    %11 = arith.truncf %3 : vector<32x128xf32> to vector<32x128xbf16>
    %cst_5 = arith.constant dense<0.000000e+00> : vector<8x128xf32>
    %12 = tpu.matmul %10, %11, %cst_5 {dimension_numbers = #tpu.dot_dimension_numbers<[1], [0], [0], [1], [0, 0, 1, 1], [], []>} : vector<8x32xbf16>, vector<32x128xbf16>, vector<8x128xf32> -> vector<8x128xf32>
    %13 = vector.broadcast %9 : vector<1x128xf32> to vector<8x128xf32>
    %14 = arith.mulf %12, %13 : vector<8x128xf32>
    %c0_6 = arith.constant 0 : index
    %c0_7 = arith.constant 0 : index
    %15 = vector.load %arg4[%c0_6, %c0_7] : memref<8x1xi32, #tpu.memory_space<vmem>>, vector<8x1xi32>
    %c1_i32 = arith.constant 1 : i32
    %16 = arith.muli %arg0, %c1_i32 : i32
    %17 = arith.addi %16, %arg1 : i32
    %c128_i32 = arith.constant 128 : i32
    %18 = arith.muli %17, %c128_i32 : i32
    %19 = tpu.iota {dimensions = array<i32: 1>} : vector<8x128xi32>
    %20 = vector.broadcast %18 : i32 to vector<8x128xi32>
    %21 = arith.addi %20, %19 : vector<8x128xi32>
    %22 = vector.broadcast %15 : vector<8x1xi32> to vector<8x128xi32>
    %23 = arith.cmpi eq, %21, %22 : vector<8x128xi32>
    %cst_8 = arith.constant dense<true> : vector<8x128xi1>
    %24 = arith.xori %23, %cst_8 : vector<8x128xi1>
    %c16_i32 = arith.constant 16 : i32
    %25 = vector.broadcast %c16_i32 : i32 to vector<8x128xi32>
    %26 = arith.cmpi slt, %21, %25 : vector<8x128xi32>
    %27 = arith.andi %24, %26 : vector<8x128xi1>
    %cst_9 = arith.constant 3.200000e+01 : f32
    %28 = vector.broadcast %cst_9 : f32 to vector<8x128xf32>
    %29 = arith.mulf %28, %14 : vector<8x128xf32>
    %30 = math.exp %29 : vector<8x128xf32>
    %cst_10 = arith.constant 24.5325298 : f32
    %31 = vector.broadcast %cst_10 : f32 to vector<8x128xf32>
    %32 = arith.mulf %30, %31 : vector<8x128xf32>
    %33 = tpu.reciprocal %30 {approx = true} : vector<8x128xf32> -> vector<8x128xf32>
    %cst_11 = arith.constant 24.5325298 : f32
    %34 = vector.broadcast %cst_11 : f32 to vector<8x128xf32>
    %35 = arith.mulf %34, %33 : vector<8x128xf32>
    %cst_12 = arith.constant 0.000000e+00 : f32
    %36 = vector.broadcast %cst_12 : f32 to vector<8x128xf32>
    %37 = arith.select %23, %35, %36 : vector<8x128xi1>, vector<8x128xf32>
    %cst_13 = arith.constant dense<0.000000e+00> : vector<128xf32>
    %38 = vector.multi_reduction <add>, %37, %cst_13 [0] : vector<8x128xf32> to vector<128xf32>
    %39 = vector.shape_cast %38 : vector<128xf32> to vector<1x128xf32>
    %cst_14 = arith.constant 0.000000e+00 : f32
    %40 = vector.broadcast %cst_14 : f32 to vector<8x128xf32>
    %41 = arith.select %27, %32, %40 : vector<8x128xi1>, vector<8x128xf32>
    %cst_15 = arith.constant dense<0.000000e+00> : vector<128xf32>
    %42 = vector.multi_reduction <add>, %41, %cst_15 [0] : vector<8x128xf32> to vector<128xf32>
    %43 = vector.shape_cast %42 : vector<128xf32> to vector<1x128xf32>
    %cst_16 = arith.constant 1.000000e+00 : f32
    %cst_17 = arith.constant 0.000000e+00 : f32
    %44 = vector.broadcast %cst_16 : f32 to vector<8x128xf32>
    %45 = vector.broadcast %cst_17 : f32 to vector<8x128xf32>
    %46 = arith.select %23, %44, %45 : vector<8x128xi1>, vector<8x128xf32>
    %cst_18 = arith.constant dense<0.000000e+00> : vector<128xf32>
    %47 = vector.multi_reduction <add>, %46, %cst_18 [0] : vector<8x128xf32> to vector<128xf32>
    %48 = vector.shape_cast %47 : vector<128xf32> to vector<1x128xf32>
    %c0_19 = arith.constant 0 : index
    %c0_20 = arith.constant 0 : index
    %c0_21 = arith.constant 0 : index
    %49 = vector.load %arg5[%c0_19, %c0_20, %c0_21] : memref<1x1x128xf32, #tpu.memory_space<vmem>>, vector<1x1x128xf32>
    %cst_22 = arith.constant 1.000000e+00 : f32
    %50 = vector.broadcast %cst_22 : f32 to vector<1x128xf32>
    %51 = arith.addf %50, %39 : vector<1x128xf32>
    %52 = math.log %51 : vector<1x128xf32>
    %53 = vector.shape_cast %52 : vector<1x128xf32> to vector<1x1x128xf32>
    %54 = arith.addf %49, %53 : vector<1x1x128xf32>
    %c0_23 = arith.constant 0 : index
    %c0_24 = arith.constant 0 : index
    %c0_25 = arith.constant 0 : index
    %55 = vector.load %arg5[%c0_23, %c0_24, %c0_25] : memref<1x1x128xf32, #tpu.memory_space<vmem>>, vector<1x1x128xf32>
    tpu.vector_store %arg5[%c0_23, %c0_24, %c0_25], %54 {strides = array<i32>} : memref<1x1x128xf32, #tpu.memory_space<vmem>>, vector<1x1x128xf32>,
    %c0_26 = arith.constant 0 : index
    %c0_27 = arith.constant 0 : index
    %c0_28 = arith.constant 0 : index
    %56 = vector.load %arg6[%c0_26, %c0_27, %c0_28] : memref<1x1x128xf32, #tpu.memory_space<vmem>>, vector<1x1x128xf32>
    %cst_29 = arith.constant 1.000000e+00 : f32
    %57 = vector.broadcast %cst_29 : f32 to vector<1x128xf32>
    %58 = arith.addf %57, %43 : vector<1x128xf32>
    %59 = math.log %58 : vector<1x128xf32>
    %60 = vector.shape_cast %59 : vector<1x128xf32> to vector<1x1x128xf32>
    %61 = arith.addf %56, %60 : vector<1x1x128xf32>
    %c0_30 = arith.constant 0 : index
    %c0_31 = arith.constant 0 : index
    %c0_32 = arith.constant 0 : index
    %62 = vector.load %arg6[%c0_30, %c0_31, %c0_32] : memref<1x1x128xf32, #tpu.memory_space<vmem>>, vector<1x1x128xf32>
    tpu.vector_store %arg6[%c0_30, %c0_31, %c0_32], %61 {strides = array<i32>} : memref<1x1x128xf32, #tpu.memory_space<vmem>>, vector<1x1x128xf32>,
    %c0_33 = arith.constant 0 : index
    %c0_34 = arith.constant 0 : index
    %c0_35 = arith.constant 0 : index
    %63 = vector.load %arg7[%c0_33, %c0_34, %c0_35] : memref<1x1x128xf32, #tpu.memory_space<vmem>>, vector<1x1x128xf32>
    %cst_36 = arith.constant 0.000000e+00 : f32
    %64 = vector.broadcast %cst_36 : f32 to vector<1x128xf32>
    %65 = arith.cmpf ogt, %48, %64 : vector<1x128xf32>
    %66 = arith.extui %65 : vector<1x128xi1> to vector<1x128xi32>
    %67 = arith.sitofp %66 : vector<1x128xi32> to vector<1x128xf32>
    %68 = vector.shape_cast %67 : vector<1x128xf32> to vector<1x1x128xf32>
    %69 = arith.addf %63, %68 : vector<1x1x128xf32>
    %c0_37 = arith.constant 0 : index
    %c0_38 = arith.constant 0 : index
    %c0_39 = arith.constant 0 : index
    %70 = vector.load %arg7[%c0_37, %c0_38, %c0_39] : memref<1x1x128xf32, #tpu.memory_space<vmem>>, vector<1x1x128xf32>
    tpu.vector_store %arg7[%c0_37, %c0_38, %c0_39], %69 {strides = array<i32>} : memref<1x1x128xf32, #tpu.memory_space<vmem>>, vector<1x1x128xf32>,
    return
  }
  func.func @transform_0(%arg0: i32, %arg1: i32) -> (i32, i32) {
    %c0_i32 = arith.constant 0 : i32
    %c0_i32_0 = arith.constant 0 : i32
    %c0_i32_1 = arith.constant 0 : i32
    return %c0_i32, %c0_i32_0 : i32, i32
  }
  func.func @transform_1(%arg0: i32, %arg1: i32) -> (i32, i32) {
    %c1_i32 = arith.constant 1 : i32
    %0 = arith.muli %arg0, %c1_i32 : i32
    %1 = arith.addi %0, %arg1 : i32
    %c0_i32 = arith.constant 0 : i32
    %c0_i32_0 = arith.constant 0 : i32
    return %c0_i32, %1 : i32, i32
  }
  func.func @transform_2(%arg0: i32, %arg1: i32) -> (i32, i32) {
    %c0_i32 = arith.constant 0 : i32
    %c0_i32_0 = arith.constant 0 : i32
    %c0_i32_1 = arith.constant 0 : i32
    return %c0_i32, %c0_i32_0 : i32, i32
  }
  func.func @transform_3(%arg0: i32, %arg1: i32) -> (i32, i32, i32) {
    %c0_i32 = arith.constant 0 : i32
    %c0_i32_0 = arith.constant 0 : i32
    %c0_i32_1 = arith.constant 0 : i32
    return %arg0, %c0_i32, %c0_i32_0 : i32, i32, i32
  }
  func.func @transform_4(%arg0: i32, %arg1: i32) -> (i32, i32, i32) {
    %c0_i32 = arith.constant 0 : i32
    %c0_i32_0 = arith.constant 0 : i32
    %c0_i32_1 = arith.constant 0 : i32
    return %arg0, %c0_i32, %c0_i32_0 : i32, i32, i32
  }
  func.func @transform_5(%arg0: i32, %arg1: i32) -> (i32, i32, i32) {
    %c0_i32 = arith.constant 0 : i32
    %c0_i32_0 = arith.constant 0 : i32
    %c0_i32_1 = arith.constant 0 : i32
    return %arg0, %c0_i32, %c0_i32_0 : i32, i32, i32
  }
}

</mosaic_0001>

<llo_original>
// kernel: proxy_anchor_loss.1
$region0: #{proxy_anchor_loss.1}
  #allocation0 [shape = 'u32[]', space=smem, size = 0x4, offset = 0x4, fixed_abs, tag = 'smem constant byte address 0x4 - core index']
  #allocation1 [shape = 'u32[144,128]{1,0:T(1,128)}', space=vmem, size = 0x12000, scoped, tag = 'internal scratch']
  #allocation2 [shape = 'bf16[8,32]{1,0:T(8,128)(2,1)}', space=vmem, size = 0x800, scoped, tag = 'scratch operand']
  %s0 = inlined_call_operand.vmem [shape: f32[8,32], index: 0, kind: input, shape index: {}]
  %s1 = inlined_call_operand.vmem [shape: f32[32,128], index: 1, kind: input, shape index: {}]
  %s2 = inlined_call_operand.vmem [shape: s32[8,1], index: 2, kind: input, shape index: {}]
  %s3 = inlined_call_operand.vmem [shape: f32[1,1,128], index: 3, kind: output, shape index: {0}]
  %s4 = inlined_call_operand.vmem [shape: f32[1,1,128], index: 4, kind: output, shape index: {1}]
  %s5 = inlined_call_operand.vmem [shape: f32[1,1,128], index: 5, kind: output, shape index: {2}]
  %6 = xla_tuple %s3, %s4, %s5
  %s7 = sld [smem:[#allocation0]]
  $region42: #{proxy_anchor_loss.1} parent=0
    _
  %s9 = ssub.s32 1, %s7
  %s10 = scalar_select 0, %s9, %s7
  // Predicated region
  $region2: #{proxy_anchor_loss.1} parent=0 // pred_check
    _
  $region3: #{proxy_anchor_loss.1} parent=0 // pred_check_branch
    %12 = sbr.rel (0) target = $region5
  $region4: #{proxy_anchor_loss.1} parent=0 // pred_region
    _
  $region5: #{proxy_anchor_loss.1} parent=0 // pred_fallthru
    _
  // Predicated region
  $region6: #{proxy_anchor_loss.1} parent=0 // pred_check
    _
  $region7: #{proxy_anchor_loss.1} parent=0 // pred_check_branch
    %14 = sbr.rel (0) target = $region9
  $region8: #{proxy_anchor_loss.1} parent=0 // pred_region
    %s15 = sadd.s32 0, 0
    %p16 = scmp.lt.s32.totalorder %s15, 0
    %s17 = scalar_select %p16, %s15, 0
    %s18 = smul.addr %s17, 8
    %s19 = scalar_lea.vmem %s1, %s18
    %s20 = sadd.s32 0, 0
  $region9: #{proxy_anchor_loss.1} parent=0 // pred_fallthru
    _
  // Predicated region
  $region10: #{proxy_anchor_loss.1} parent=0 // pred_check
    _
  $region11: #{proxy_anchor_loss.1} parent=0 // pred_check_branch
    %22 = sbr.rel (0) target = $region13
  $region12: #{proxy_anchor_loss.1} parent=0 // pred_region
    _
  $region13: #{proxy_anchor_loss.1} parent=0 // pred_fallthru
    _
  %s23 = sadd.s32 0, 0
  %p24 = scmp.lt.s32.totalorder %s23, 0
  %s25 = scalar_select %p24, %s23, 0
  %s26 = smul.addr %s25, 8
  %s27 = scalar_lea.vmem %s1, %s26
  %s28 = sadd.s32 0, 0
  %p29 = scmp.lt.s32.totalorder %s28, 0
  %s30 = scalar_select %p29, %s28, 0
  %s31 = smul.addr %s30, 8
  %s32 = scalar_lea.vmem %s1, %s31
  %s33 = sadd.s32 0, 0
  %p35 = scmp.eq.s32.totalorder 0, 0
  // Predicated region
  $region14: #{proxy_anchor_loss.1} parent=0 // pred_check
    %p36 = pneg %p35
  $region15: #{proxy_anchor_loss.1} parent=0 // pred_check_branch
    %38 = sbr.rel (%p36) target = $region17
  $region16: #{proxy_anchor_loss.1} parent=0 // pred_region
    %v39 = vld [vmem:[%s0] sm:$0xff]
    %v40 = vmul.f32 %v39, %v39
    %vm41 = vcmask 261120
    %v42 = vsel %vm41, %v40, 0.0
    %43 = vadd.xlane.f32.xlu0 %v42
    %v44 = vpop.xlane.xlu0 %43
    %v45 = vadd.f32 %v44, 1e-12
    %v46 = vrsqrt.pop %v45
    %v47 = vmul.f32 %v45, %v46
    %vm48 = vcmp.eq.f32.partialorder %v45, inf
    %v49 = vsel %vm48, %v45, %v47
    %vm50 = vcmp.eq.f32.partialorder %v45, 0.0
    %v51 = vand.u32 %v45, 2147483648
    %v52 = vsel %vm50, %v51, %v49
    %v53 = vrcp.pop %v52
    %v54 = vmul.f32 %v39, %v53
    %v55 = vpack.c.bf16 %v54, %v54
    %vm56 = vcmask 257024
    %57 = vst.msk [vmem:[#allocation2] sm:$0xf] %vm56, %v55
    %58 = vst [vmem:[%s3] sm:$0x1] 0.0
    %59 = vst [vmem:[%s4] sm:$0x1] 0.0
    %60 = vst [vmem:[%s5] sm:$0x1] 0.0
  $region17: #{proxy_anchor_loss.1} parent=0 // pred_fallthru
    _
  %v61 = vld [vmem:[%s32] sm:$0xff]
  %v62 = vld [vmem:[%s32 + $0x8] sm:$0xff]
  %v63 = vld [vmem:[%s32 + $0x10] sm:$0xff]
  %v64 = vld [vmem:[%s32 + $0x18] sm:$0xff]
  %v65 = vmul.f32 %v61, %v61
  %v66 = vmul.f32 %v62, %v62
  %v67 = vmul.f32 %v63, %v63
  %v68 = vmul.f32 %v64, %v64
  %v69 = vadd.f32 %v65, %v66
  %v70 = vadd.f32 %v69, %v67
  %v71 = vadd.f32 %v70, %v68
  %v72 = vrot.slane %v71, 4
  %v73 = vadd.f32 %v71, %v72
  %v74 = vrot.slane %v73, 2
  %v75 = vadd.f32 %v73, %v74
  %v76 = vrot.slane %v75, 1
  %v77 = vadd.f32 %v75, %v76
  %v78 = vadd.f32 %v77, 1e-12
  %v79 = vrsqrt.pop %v78
  %v80 = vld [vmem:[#allocation2] sm:$0xf]
  %v81 = vpack.c.bf16 %v62, %v61
  %v82 = vpack.c.bf16 %v64, %v63
  %vm83 = vcmask 261120
  %v85 = vsel %vm83, %v80, 0
  %87 = vmatprep.subr.bf16.mxu0 0
  %88 = vmatpush1.bf16.msra.mxu0 0
  %89 = vmatprep.subr.bf16.mxu0 0
  %90 = vmatpush1.bf16.msra.mxu0 0
  %91 = vmatprep.subr.bf16.mxu0 0
  %92 = vmatpush1.bf16.msra.mxu0 0
  %93 = vmatprep.subr.bf16.mxu0 0
  %94 = vmatpush1.bf16.msra.mxu0 0
  %95 = vmatprep.subr.bf16.mxu0 0
  %96 = vmatpush1.bf16.msra.mxu0 0
  %97 = vmatprep.subr.bf16.mxu0 0
  %98 = vmatpush1.bf16.msra.mxu0 0
  %99 = vmatprep.subr.bf16.mxu0 0
  %100 = vmatpush1.bf16.msra.mxu0 %v82
  %101 = vmatprep.subr.bf16.mxu0 0
  %102 = vmatpush1.bf16.msra.mxu0 %v81
  %103 = vmatprep.subr.bf16.mxu0 0
  %104 = vmatpush2.bf16.msra.mxu0 0
  %105 = vmatprep.subr.bf16.mxu0 0
  %106 = vmatpush2.bf16.msra.mxu0 0
  %107 = vmatprep.subr.bf16.mxu0 0
  %108 = vmatpush2.bf16.msra.mxu0 0
  %109 = vmatprep.subr.bf16.mxu0 0
  %110 = vmatpush2.bf16.msra.mxu0 0
  %111 = vmatprep.subr.bf16.mxu0 0
  %112 = vmatpush2.bf16.msra.mxu0 0
  %113 = vmatprep.subr.bf16.mxu0 0
  %114 = vmatpush2.bf16.msra.mxu0 0
  %115 = vmatprep.subr.bf16.mxu0 0
  %116 = vmatpush2.bf16.msra.mxu0 0
  %117 = vmatprep.subr.bf16.mxu0 0
  %118 = vmatpush2.bf16.msra.mxu0 0
  %119 = vmatprep.mubr.bf16.mxu0 0
  %120 = vmatmul.mubr.bf16.gmra.mxu0 %v85
  %v121 = vpop.f32.mrf.mxu0
  %v122 = vadd.f32 0.0, %v121
  %v123 = vpop.f32.mrf.mxu0
  %v124 = vpop.f32.mrf.mxu0
  %v125 = vpop.f32.mrf.mxu0
  %126 = vdwg.mxu0
  %v127 = vmul.f32 %v122, %v79
  %v128 = vld [vmem:[%s2] sm:$0xff]
  %s129 = sadd.s32 0, 0
  %s130 = smul.u32 %s129, 128
  %v131 = vlaneseq
  %v132 = vand.u32 %v131, 127
  %v133 = vstv %s130
  %v134 = vadd.s32 %v133, %v132
  %135 = vset.pattern.permute.xlu0 0
  %136 = vperm.xlu0 %135, %v128
  %v137 = vpop.permute.xlu0 %136
  %vm138 = vcmp.eq.s32.totalorder %v134, %v137
  %vm139 = vmxor %vm138, 1
  %vm140 = vcmp.lt.s32.totalorder %v134, 16
  %vm141 = vmand %vm139, %vm140
  %v142 = vmul.f32 %v127, 32.0
  %v143 = vmul.f32 %v142, 1.442695
  %v144 = vpow.pop %v143
  %v145 = vmul.f32 %v144, 24.53253
  %v146 = vrcp.pop %v144
  %v147 = vmul.f32 %v146, 24.53253
  %v148 = vsel %vm138, %v147, 0.0
  %v149 = vrot.slane %v148, 4
  %v150 = vadd.f32 %v148, %v149
  %v151 = vrot.slane %v150, 2
  %v152 = vadd.f32 %v150, %v151
  %v153 = vrot.slane %v152, 1
  %v154 = vadd.f32 %v152, %v153
  %v155 = vsel %vm141, %v145, 0.0
  %v156 = vrot.slane %v155, 4
  %v157 = vadd.f32 %v155, %v156
  %v158 = vrot.slane %v157, 2
  %v159 = vadd.f32 %v157, %v158
  %v160 = vrot.slane %v159, 1
  %v161 = vadd.f32 %v159, %v160
  %v162 = vsel %vm138, 1.0, 0.0
  %v163 = vrot.slane %v162, 4
  %v164 = vadd.f32 %v162, %v163
  %v165 = vrot.slane %v164, 2
  %v166 = vadd.f32 %v164, %v165
  %v167 = vrot.slane %v166, 1
  %v168 = vadd.f32 %v166, %v167
  %v169 = vld [vmem:[%s3] sm:$0x1]
  %v170 = vadd.f32 %v154, 1.0
  %v171 = vlog2.pop %v170
  %v172 = vmul.f32 %v171, 0.6931472
  %v173 = vadd.f32 %v169, %v172
  %174 = vst [vmem:[%s3] sm:$0x1] %v173
  %v175 = vld [vmem:[%s4] sm:$0x1]
  %v176 = vadd.f32 %v161, 1.0
  %v177 = vlog2.pop %v176
  %v178 = vmul.f32 %v177, 0.6931472
  %v179 = vadd.f32 %v175, %v178
  %180 = vst [vmem:[%s4] sm:$0x1] %v179
  %v181 = vld [vmem:[%s5] sm:$0x1]
  %vm182 = vcmp.gt.f32.partialorder %v168, 0.0
  %v183 = vsel %vm182, 1, 0
  %v184 = vcvt.s32.f32 %v183
  %v185 = vadd.f32 %v181, %v184
  %186 = vst [vmem:[%s5] sm:$0x1] %v185
  // Predicated region
  $region18: #{proxy_anchor_loss.1} parent=0 // pred_check
    _
  $region19: #{proxy_anchor_loss.1} parent=0 // pred_check_branch
    %188 = sbr.rel (0) target = $region21
  $region20: #{proxy_anchor_loss.1} parent=0 // pred_region
    _
  $region21: #{proxy_anchor_loss.1} parent=0 // pred_fallthru
    _
  // Predicated region
  $region22: #{proxy_anchor_loss.1} parent=0 // pred_check
    _
  $region23: #{proxy_anchor_loss.1} parent=0 // pred_check_branch
    %190 = sbr.rel (0) target = $region25
  $region24: #{proxy_anchor_loss.1} parent=0 // pred_region
    _
  $region25: #{proxy_anchor_loss.1} parent=0 // pred_fallthru
    _
  // Predicated region
  $region26: #{proxy_anchor_loss.1} parent=0 // pred_check
    _
  $region27: #{proxy_anchor_loss.1} parent=0 // pred_check_branch
    %192 = sbr.rel (0) target = $region29
  $region28: #{proxy_anchor_loss.1} parent=0 // pred_region
    _
  $region29: #{proxy_anchor_loss.1} parent=0 // pred_fallthru
    _
  // Predicated region
  $region30: #{proxy_anchor_loss.1} parent=0 // pred_check
    _
  $region31: #{proxy_anchor_loss.1} parent=0 // pred_check_branch
    %194 = sbr.rel (0) target = $region33
  $region32: #{proxy_anchor_loss.1} parent=0 // pred_region
    _
  $region33: #{proxy_anchor_loss.1} parent=0 // pred_fallthru
    _
  // Predicated region
  $region34: #{proxy_anchor_loss.1} parent=0 // pred_check
    _
  $region35: #{proxy_anchor_loss.1} parent=0 // pred_check_branch
    %196 = sbr.rel (0) target = $region37
  $region36: #{proxy_anchor_loss.1} parent=0 // pred_region
    _
  $region37: #{proxy_anchor_loss.1} parent=0 // pred_fallthru
    _
  // Predicated region
  $region38: #{proxy_anchor_loss.1} parent=0 // pred_check
    _
  $region39: #{proxy_anchor_loss.1} parent=0 // pred_check_branch
    %198 = sbr.rel (0) target = $region41
  $region40: #{proxy_anchor_loss.1} parent=0 // pred_region
    _
  $region41: #{proxy_anchor_loss.1} parent=0 // pred_fallthru
    _

</llo_original>
